<compile_context>
chip_gen: v6e
topology: v6e:2x2x1
jax: 0.10.0
libtpu: 0.0.40
codegen_flags: <defaults>
</compile_context>

<pallas_src>
from typing import NamedTuple, Optional

import jax
import jax.numpy as jnp
from jax.experimental import pallas as pl
from jax.experimental.pallas import tpu as pltpu


def _round_up(x, m):
    return (x + m - 1) // m * m


# ---------------------------------------------------------------------------
# Generation-aware tiling defaults.
# ---------------------------------------------------------------------------

_PHYS_VMEM_BYTES = {"v5e": 128 << 20, "v6e": 128 << 20, "v7x": 64 << 20}
# Row-tile targets from the weight-streaming roofline (arithmetic intensity
# ~ 2*tm/itemsize FLOP per weight byte vs. each chip's compute/HBM ridge).
_TM_TARGET = {"v5e": 512, "v6e": 1024, "v7x": 512, "unknown": 512}
# v6e: tn=512 halves accumulator RMW traffic and per-grid-step overhead;
# v7x spends its smaller (64 MiB) VMEM on tm instead, v5e keeps 256.
_TN_TARGET = {"v5e": 256, "v6e": 512, "v7x": 256, "unknown": 256}


def _tpu_generation() -> str:
    try:
        kind = jax.devices()[0].device_kind.lower()
    except Exception:
        return "unknown"
    if "v5 lite" in kind or "v5e" in kind or "v5lite" in kind:
        return "v5e"
    if "v6" in kind:
        return "v6e"
    if "v7" in kind or "7x" in kind:
        return "v7x"
    return "unknown"


def _vmem_budget_bytes(gen: str) -> int:
    try:
        cap = int(pltpu.get_tpu_info().vmem_capacity_bytes)
    except Exception:
        cap = _PHYS_VMEM_BYTES.get(gen, 64 << 20)
    # ~22% headroom for compiler scratch (critical on v7x's 64 MiB VMEM).
    return int(cap * 0.78)


def _sublane_min(*dtypes) -> int:
    sub = 8
    for dt in dtypes:
        sub = max(sub, {4: 8, 2: 16, 1: 32}.get(jnp.dtype(dt).itemsize, 8))
    return sub


def _vmem_estimate_bytes(tm, tn, e_pad, n_tiles, w_isz, x_isz, o_isz):
    """Rough upper bound on the kernel's VMEM working set."""
    x_buf = 2 * tm * e_pad * x_isz               # input row tile, 2 buffers
    o_buf = 2 * tm * e_pad * o_isz               # output row tile, 2 buffers
    acc = tm * e_pad * 4                         # f32 accumulator scratch
    wfc = 2 * e_pad * 2 * tn * w_isz             # fused [Wg|Wu] tile, 2 bufs
    wpr = 2 * tn * e_pad * w_isz                 # W_proj tile, 2 bufs
    bias = 2 * (n_tiles * 2 * tn * 4 + e_pad * 4)  # resident biases
    tmp = 2 * tm * 2 * tn * 4                    # fused/g f32 temporaries
    return x_buf + o_buf + acc + wfc + wpr + bias + tmp


# ---------------------------------------------------------------------------
# Kernel.
# ---------------------------------------------------------------------------

def _telechat_mlp_kernel(x_ref, wfu_ref, bfu_ref, wp_ref, bp_ref, o_ref,
                         acc_ref):
    # x_ref:   (tm, e_pad)       activation row tile
    # wfu_ref: (e_pad, 2*tn)     fused [W_gate | W_up] weight tile
    # bfu_ref: (n_tiles, 2*tn)   fused [b_gate | b_up] biases (VMEM resident)
    # wp_ref:  (tn, e_pad)       W_proj tile
    # bp_ref:  (1, e_pad)        b_proj (VMEM resident)
    # o_ref:   (tm, e_pad)       output row tile (resident across axis 1)
    # acc_ref: (tm, e_pad) f32   accumulator scratch
    n = pl.program_id(1)

    x = x_ref[...]

    # One fused MXU pass producing [gate | up] for this intermediate tile.
    fused = jnp.dot(x, wfu_ref[...], preferred_element_type=jnp.float32)
    fused = fused + bfu_ref[pl.ds(n, 1), :].astype(jnp.float32)

    tn = fused.shape[1] // 2          # static; multiple of 128 -> free slice
    gate = fused[:, :tn]
    up = fused[:, tn:]

    # swiglu in f32: silu(gate) * up   (sigmoid goes to the EUP slot)
    g = (gate * jax.nn.sigmoid(gate)) * up

    partial = jnp.dot(g.astype(wp_ref.dtype), wp_ref[...],
                      preferred_element_type=jnp.float32)

    # First reduction step writes the accumulator directly (with b_proj
    # folded in); later steps read-modify-write.  Saves one full (tm, e_pad)
    # zero-init store and the epilogue add per row tile.
    @pl.when(n == 0)
    def _():
        acc_ref[...] = partial + bp_ref[...].astype(jnp.float32)

    @pl.when(n > 0)
    def _():
        acc_ref[...] += partial

    @pl.when(n == pl.num_programs(1) - 1)
    def _():
        o_ref[...] = acc_ref[...].astype(o_ref.dtype)


# ---------------------------------------------------------------------------
# Parameter preparation (do once at weight-load time; cache the result).
# ---------------------------------------------------------------------------

class TelechatMLPParams(NamedTuple):
    w_fu: jax.Array      # (e_pad, n_tiles * 2 * tn)  interleaved [Wg|Wu] tiles
    b_fu: jax.Array      # (n_tiles, 2 * tn) f32      interleaved [bg|bu] rows
    w_proj: jax.Array    # (i_pad, e_pad)
    b_proj: jax.Array    # (1, e_pad) f32
    embed_dim: int
    intermediate_size: int
    e_pad: int
    i_pad: int
    tile_n: int


def prepare_telechat_mlp_params(w_fc, b_fc, w_proj, b_proj, *,
                                compute_dtype=None,
                                tile_n: Optional[int] = None
                                ) -> TelechatMLPParams:
    """Split / pad / interleave the TELECHATMLP weights ONCE.

    w_fc: (E, 2*I), b_fc: (2*I,), w_proj: (I, E), b_proj: (E,).
    Pass compute_dtype=jnp.bfloat16 for the fast path.
    """
    E, two_i = w_fc.shape
    I = two_i // 2
    assert w_proj.shape == (I, E)

    w_dtype = jnp.dtype(compute_dtype) if compute_dtype is not None else w_fc.dtype
    gen = _tpu_generation()
    budget = _vmem_budget_bytes(gen)

    e_pad = _round_up(E, 128)

    if tile_n is None:
        tile_n = _TN_TARGET[gen]
        w_isz = jnp.dtype(w_dtype).itemsize
        # Keep the double-buffered weight tiles well under half the budget.
        while tile_n > 128 and 2 * 3 * e_pad * tile_n * w_isz > 0.45 * budget:
            tile_n //= 2
    tn = max(128, min(tile_n, _round_up(I, 128)))
    tn = _round_up(tn, 128)
    i_pad = _round_up(I, tn)
    n_tiles = i_pad // tn

    # torch.chunk(x, 2, dim=-1) semantics: first half = gate, second = up.
    w_gate, w_up = w_fc[:, :I], w_fc[:, I:]
    b_gate, b_up = b_fc[:I], b_fc[I:]

    def pad2(w):
        return jnp.pad(w, ((0, e_pad - E), (0, i_pad - I))).astype(w_dtype)

    wg_p, wu_p = pad2(w_gate), pad2(w_up)
    # Interleave per-n-tile as [Wg_tile | Wu_tile]: one fused (e_pad, 2*tn)
    # MXU dot per step; the split offset tn is a static multiple of 128.
    w_fu = jnp.stack([wg_p.reshape(e_pad, n_tiles, tn),
                      wu_p.reshape(e_pad, n_tiles, tn)], axis=2)
    w_fu = w_fu.reshape(e_pad, n_tiles * 2 * tn)

    bg_p = jnp.pad(b_gate, (0, i_pad - I)).astype(jnp.float32)
    bu_p = jnp.pad(b_up, (0, i_pad - I)).astype(jnp.float32)
    b_fu = jnp.stack([bg_p.reshape(n_tiles, tn),
                      bu_p.reshape(n_tiles, tn)], axis=1)
    b_fu = b_fu.reshape(n_tiles, 2 * tn)

    w_proj_p = jnp.pad(w_proj, ((0, i_pad - I), (0, e_pad - E))).astype(w_dtype)
    b_proj_p = jnp.pad(b_proj, (0, e_pad - E)).astype(jnp.float32).reshape(1, e_pad)

    return TelechatMLPParams(w_fu, b_fu, w_proj_p, b_proj_p,
                             E, I, e_pad, i_pad, tn)


# ---------------------------------------------------------------------------
# Forward pass.
# ---------------------------------------------------------------------------

def telechat_mlp_apply(hidden_states, params: TelechatMLPParams, *,
                       tile_m: Optional[int] = None,
                       vmem_limit_bytes: Optional[int] = None):
    """Fused TELECHATMLP forward: dropout(c_proj(swiglu(c_fc(x)))) (eval mode)."""
    B, S, E = hidden_states.shape
    assert E == params.embed_dim
    M = B * S
    out_dtype = hidden_states.dtype
    w_dtype = params.w_fu.dtype
    x_dtype = w_dtype                     # compute in the weight dtype

    e_pad, i_pad, tn = params.e_pad, params.i_pad, params.tile_n
    n_tiles = i_pad // tn

    gen = _tpu_generation()
    if vmem_limit_bytes is None:
        vmem_limit_bytes = _vmem_budget_bytes(gen)

    sub = _sublane_min(x_dtype, out_dtype)
    w_isz = jnp.dtype(w_dtype).itemsize
    x_isz = jnp.dtype(x_dtype).itemsize
    o_isz = jnp.dtype(out_dtype).itemsize

    if tile_m is None:
        tile_m = _TM_TARGET[gen]
    tm = max(sub, min(tile_m, _round_up(M, sub)))
    tm = _round_up(tm, sub)
    # Shrink the row tile until the working set fits the VMEM budget.
    while tm > sub and _vmem_estimate_bytes(tm, tn, e_pad, n_tiles, w_isz,
                                            x_isz, o_isz) > vmem_limit_bytes:
        tm = max(sub, _round_up(tm // 2, sub))
    m_pad = _round_up(M, tm)

    x2d = hidden_states.reshape(M, E).astype(x_dtype)
    if m_pad != M or e_pad != E:
        x2d = jnp.pad(x2d, ((0, m_pad - M), (0, e_pad - E)))

    grid = (m_pad // tm, n_tiles)

    # Advisory cost estimate so XLA can overlap surrounding ops.
    I = params.intermediate_size
    weight_bytes = (params.w_fu.size * w_isz + params.w_proj.size * w_isz
                    + params.b_fu.size * 4 + params.b_proj.size * 4)
    cost = pl.CostEstimate(
        flops=int(6 * M * I * E),
        transcendentals=int(M * I),
        bytes_accessed=int(weight_bytes * (m_pad // tm)
                           + m_pad * e_pad * (x_isz + o_isz)),
    )

    out2d = pl.pallas_call(
        _telechat_mlp_kernel,
        out_shape=jax.ShapeDtypeStruct((m_pad, e_pad), out_dtype),
        grid_spec=pltpu.PrefetchScalarGridSpec(
            num_scalar_prefetch=0,
            grid=grid,
            in_specs=[
                pl.BlockSpec((tm, e_pad), lambda i, n: (i, 0)),        # x rows
                pl.BlockSpec((e_pad, 2 * tn), lambda i, n: (0, n)),    # [Wg|Wu]
                pl.BlockSpec((n_tiles, 2 * tn), lambda i, n: (0, 0)),  # gate/up bias
                pl.BlockSpec((tn, e_pad), lambda i, n: (n, 0)),        # W_proj
                pl.BlockSpec((1, e_pad), lambda i, n: (0, 0)),         # b_proj
            ],
            out_specs=pl.BlockSpec((tm, e_pad), lambda i, n: (i, 0)),
            scratch_shapes=[pltpu.VMEM((tm, e_pad), jnp.float32)],
        ),
        compiler_params=pltpu.CompilerParams(
            # Row tiles parallel (megacore), intermediate reduction arbitrary.
            # On v7x the row split across the 2 TCs only pays once tm makes
            # each core compute-bound; the per-generation tm targets ensure it.
            dimension_semantics=("parallel", "arbitrary"),
            vmem_limit_bytes=int(vmem_limit_bytes),
        ),
        cost_estimate=cost,
    )(x2d, params.w_fu, params.b_fu, params.w_proj, params.b_proj)

    if m_pad != M or e_pad != E:
        out2d = out2d[:M, :E]
    # TODO(synk): training-mode dropout(resid_pdrop) not implemented (eval identity).
    return out2d.reshape(B, S, E)


def telechat_mlp(hidden_states, w_fc, b_fc, w_proj, b_proj, **kwargs):
    """One-shot convenience wrapper (re-pads weights every call — prefer
    prepare_telechat_mlp_params + telechat_mlp_apply in production)."""
    params = prepare_telechat_mlp_params(w_fc, b_fc, w_proj, b_proj)
    return telechat_mlp_apply(hidden_states, params, **kwargs)


def telechat_mlp_ref(hidden_states, w_fc, b_fc, w_proj, b_proj):
    """Pure-JAX reference matching the PyTorch forward (eval mode)."""
    h = jnp.matmul(hidden_states, w_fc) + b_fc
    I = w_fc.shape[1] // 2
    a, b = h[..., :I], h[..., I:]
    return jnp.matmul(jax.nn.silu(a) * b, w_proj) + b_proj


if __name__ == "__main__":
    # Config (activation_function='silu', add_bias_linear=True):
    batch, seq = 2, 8
    hidden_size = 32            # config.hidden_size (embed_dim)
    intermediate_size = 64
    up_intermediate_size = 2 * intermediate_size

    key = jax.random.PRNGKey(0)
    kx, kfc, kbfc, kproj, kbproj = jax.random.split(key, 5)

    # Conv1D weights ~ N(0, 0.02); use non-zero biases to exercise bias paths.
    w_fc = (0.02 * jax.random.normal(
        kfc, (hidden_size, up_intermediate_size))).astype(jnp.float32)
    b_fc = (0.02 * jax.random.normal(
        kbfc, (up_intermediate_size,))).astype(jnp.float32)
    w_proj = (0.02 * jax.random.normal(
        kproj, (intermediate_size, hidden_size))).astype(jnp.float32)
    b_proj = (0.02 * jax.random.normal(
        kbproj, (hidden_size,))).astype(jnp.float32)

    hidden_states = jax.random.normal(
        kx, (batch, seq, hidden_size)).astype(jnp.float32)

    ref = telechat_mlp_ref(hidden_states, w_fc, b_fc, w_proj, b_proj)

    # f32 path (exact vs. reference).
    params_f32 = prepare_telechat_mlp_params(w_fc, b_fc, w_proj, b_proj)
    out = jax.block_until_ready(telechat_mlp_apply(hidden_states, params_f32))
    assert out.shape == (batch, seq, hidden_size)
    assert jnp.allclose(out, ref, atol=1e-5, rtol=1e-5), "f32 mismatch vs reference"

    # bf16 fast path (what production should feed the kernel).
    params_bf16 = prepare_telechat_mlp_params(
        w_fc, b_fc, w_proj, b_proj, compute_dtype=jnp.bfloat16)
    out_bf16 = jax.block_until_ready(
        telechat_mlp_apply(hidden_states.astype(jnp.bfloat16), params_bf16))
    assert out_bf16.shape == (batch, seq, hidden_size)
    assert jnp.allclose(out_bf16.astype(jnp.float32), ref,
                        atol=5e-3, rtol=5e-2), "bf16 mismatch vs reference"

    print("KERNEL_OK")
</pallas_src>

<mosaic_0001>
module attributes {stable_mosaic.version = 11 : i64} {
  func.func @_telechat_mlp_kernel(%arg0: i32, %arg1: i32, %arg2: memref<16x128xf32, #tpu.memory_space<vmem>>, %arg3: memref<128x256xf32, #tpu.memory_space<vmem>>, %arg4: memref<1x256xf32, #tpu.memory_space<vmem>>, %arg5: memref<128x128xf32, #tpu.memory_space<vmem>>, %arg6: memref<1x128xf32, #tpu.memory_space<vmem>>, %arg7: memref<16x128xf32, #tpu.memory_space<vmem>>, %arg8: memref<16x128xf32, #tpu.memory_space<vmem>>) attributes {dimension_semantics = [#tpu.dimension_semantics<parallel>, #tpu.dimension_semantics<arbitrary>], iteration_bounds = array<i64: 1, 1>, scalar_prefetch = 0 : i64, scratch_operands = 1 : i64, tpu.core_type = #tpu.core_type<tc>, window_params = [{transform_indices = @transform_0, window_bounds = array<i64: 16, 128>}, {transform_indices = @transform_1, window_bounds = array<i64: 128, 256>}, {pipeline_mode = #tpu.pipeline_mode<synchronous>, transform_indices = @transform_2, window_bounds = array<i64: 1, 256>}, {transform_indices = @transform_3, window_bounds = array<i64: 128, 128>}, {pipeline_mode = #tpu.pipeline_mode<synchronous>, transform_indices = @transform_4, window_bounds = array<i64: 1, 128>}, {transform_indices = @transform_5, window_bounds = array<i64: 16, 128>}]} {
    %c0 = arith.constant 0 : index
    %c0_0 = arith.constant 0 : index
    %0 = vector.load %arg2[%c0, %c0_0] : memref<16x128xf32, #tpu.memory_space<vmem>>, vector<16x128xf32>
    %c0_1 = arith.constant 0 : index
    %c0_2 = arith.constant 0 : index
    %1 = vector.load %arg3[%c0_1, %c0_2] : memref<128x256xf32, #tpu.memory_space<vmem>>, vector<128x256xf32>
    %cst = arith.constant dense<0.000000e+00> : vector<16x256xf32>
    %2 = tpu.matmul %0, %1, %cst {dimension_numbers = #tpu.dot_dimension_numbers<[1], [0], [0], [1], [0, 0, 1, 1], [], []>} : vector<16x128xf32>, vector<128x256xf32>, vector<16x256xf32> -> vector<16x256xf32>
    %3 = arith.index_cast %arg1 : i32 to index
    %c0_3 = arith.constant 0 : index
    %4 = vector.load %arg4[%3, %c0_3] : memref<1x256xf32, #tpu.memory_space<vmem>>, vector<1x256xf32>
    %5 = vector.broadcast %4 : vector<1x256xf32> to vector<16x256xf32>
    %6 = arith.addf %2, %5 : vector<16x256xf32>
    %7 = vector.extract_strided_slice %6 {offsets = [0, 0], sizes = [16, 128], strides = [1, 1]} : vector<16x256xf32> to vector<16x128xf32>
    %8 = vector.extract_strided_slice %6 {offsets = [0, 128], sizes = [16, 128], strides = [1, 1]} : vector<16x256xf32> to vector<16x128xf32>
    %9 = arith.negf %7 : vector<16x128xf32>
    %10 = math.exp %9 : vector<16x128xf32>
    %cst_4 = arith.constant 1.000000e+00 : f32
    %11 = vector.broadcast %cst_4 : f32 to vector<16x128xf32>
    %12 = arith.addf %11, %10 : vector<16x128xf32>
    %13 = arith.divf %11, %12 : vector<16x128xf32>
    %14 = arith.mulf %7, %13 : vector<16x128xf32>
    %15 = arith.mulf %14, %8 : vector<16x128xf32>
    %c0_5 = arith.constant 0 : index
    %c0_6 = arith.constant 0 : index
    %16 = vector.load %arg5[%c0_5, %c0_6] : memref<128x128xf32, #tpu.memory_space<vmem>>, vector<128x128xf32>
    %cst_7 = arith.constant dense<0.000000e+00> : vector<16x128xf32>
    %17 = tpu.matmul %15, %16, %cst_7 {dimension_numbers = #tpu.dot_dimension_numbers<[1], [0], [0], [1], [0, 0, 1, 1], [], []>} : vector<16x128xf32>, vector<128x128xf32>, vector<16x128xf32> -> vector<16x128xf32>
    %c0_i32 = arith.constant 0 : i32
    %18 = arith.cmpi eq, %arg1, %c0_i32 : i32
    %19 = arith.extui %18 : i1 to i32
    %c0_i32_8 = arith.constant 0 : i32
    %20 = arith.cmpi ne, %19, %c0_i32_8 : i32
    scf.if %20 {
      %c0_13 = arith.constant 0 : index
      %c0_14 = arith.constant 0 : index
      %27 = vector.load %arg6[%c0_13, %c0_14] : memref<1x128xf32, #tpu.memory_space<vmem>>, vector<1x128xf32>
      %28 = vector.broadcast %27 : vector<1x128xf32> to vector<16x128xf32>
      %29 = arith.addf %17, %28 : vector<16x128xf32>
      %c0_15 = arith.constant 0 : index
      %c0_16 = arith.constant 0 : index
      %30 = vector.load %arg8[%c0_15, %c0_16] : memref<16x128xf32, #tpu.memory_space<vmem>>, vector<16x128xf32>
      tpu.vector_store %arg8[%c0_15, %c0_16], %29 {strides = array<i32>} : memref<16x128xf32, #tpu.memory_space<vmem>>, vector<16x128xf32>,
    } else {
    }
    %c0_i32_9 = arith.constant 0 : i32
    %21 = arith.cmpi sgt, %arg1, %c0_i32_9 : i32
    %22 = arith.extui %21 : i1 to i32
    %c0_i32_10 = arith.constant 0 : i32
    %23 = arith.cmpi ne, %22, %c0_i32_10 : i32
    scf.if %23 {
      %c0_13 = arith.constant 0 : index
      %c0_14 = arith.constant 0 : index
      %27 = vector.load %arg8[%c0_13, %c0_14] : memref<16x128xf32, #tpu.memory_space<vmem>>, vector<16x128xf32>
      %28 = arith.addf %27, %17 : vector<16x128xf32>
      %c0_15 = arith.constant 0 : index
      %c0_16 = arith.constant 0 : index
      %29 = vector.load %arg8[%c0_15, %c0_16] : memref<16x128xf32, #tpu.memory_space<vmem>>, vector<16x128xf32>
      tpu.vector_store %arg8[%c0_15, %c0_16], %28 {strides = array<i32>} : memref<16x128xf32, #tpu.memory_space<vmem>>, vector<16x128xf32>,
    } else {
    }
    %c0_i32_11 = arith.constant 0 : i32
    %24 = arith.cmpi eq, %arg1, %c0_i32_11 : i32
    %25 = arith.extui %24 : i1 to i32
    %c0_i32_12 = arith.constant 0 : i32
    %26 = arith.cmpi ne, %25, %c0_i32_12 : i32
    scf.if %26 {
      %c0_13 = arith.constant 0 : index
      %c0_14 = arith.constant 0 : index
      %27 = vector.load %arg8[%c0_13, %c0_14] : memref<16x128xf32, #tpu.memory_space<vmem>>, vector<16x128xf32>
      %c0_15 = arith.constant 0 : index
      %c0_16 = arith.constant 0 : index
      %28 = vector.load %arg7[%c0_15, %c0_16] : memref<16x128xf32, #tpu.memory_space<vmem>>, vector<16x128xf32>
      tpu.vector_store %arg7[%c0_15, %c0_16], %27 {strides = array<i32>} : memref<16x128xf32, #tpu.memory_space<vmem>>, vector<16x128xf32>,
    } else {
    }
    return
  }
  func.func @transform_0(%arg0: i32, %arg1: i32) -> (i32, i32) {
    %c0_i32 = arith.constant 0 : i32
    %c0_i32_0 = arith.constant 0 : i32
    return %arg0, %c0_i32 : i32, i32
  }
  func.func @transform_1(%arg0: i32, %arg1: i32) -> (i32, i32) {
    %c0_i32 = arith.constant 0 : i32
    %c0_i32_0 = arith.constant 0 : i32
    return %c0_i32, %arg1 : i32, i32
  }
  func.func @transform_2(%arg0: i32, %arg1: i32) -> (i32, i32) {
    %c0_i32 = arith.constant 0 : i32
    %c0_i32_0 = arith.constant 0 : i32
    %c0_i32_1 = arith.constant 0 : i32
    return %c0_i32, %c0_i32_0 : i32, i32
  }
  func.func @transform_3(%arg0: i32, %arg1: i32) -> (i32, i32) {
    %c0_i32 = arith.constant 0 : i32
    %c0_i32_0 = arith.constant 0 : i32
    return %arg1, %c0_i32 : i32, i32
  }
  func.func @transform_4(%arg0: i32, %arg1: i32) -> (i32, i32) {
    %c0_i32 = arith.constant 0 : i32
    %c0_i32_0 = arith.constant 0 : i32
    %c0_i32_1 = arith.constant 0 : i32
    return %c0_i32, %c0_i32_0 : i32, i32
  }
  func.func @transform_5(%arg0: i32, %arg1: i32) -> (i32, i32) {
    %c0_i32 = arith.constant 0 : i32
    %c0_i32_0 = arith.constant 0 : i32
    return %arg0, %c0_i32 : i32, i32
  }
}

</mosaic_0001>

<llo_original>
// kernel: tpu_custom_call.1
$region0: #{tpu_custom_call.1}
  #allocation0 [shape = 'u32[]', space=smem, size = 0x4, offset = 0x4, fixed_abs, tag = 'smem constant byte address 0x4 - core index']
  #allocation1 [shape = 'u32[144,128]{1,0:T(1,128)}', space=vmem, size = 0x12000, scoped, tag = 'internal scratch']
  #allocation2 [shape = 'f32[16,128]{1,0:T(8,128)}', space=vmem, size = 0x2000, scoped, tag = 'scratch operand']
  %s0 = inlined_call_operand.hbm [shape: f32[16,128], index: 0, kind: input, shape index: {}]
  %s1 = inlined_call_operand.hbm [shape: f32[128,256], index: 1, kind: input, shape index: {}]
  %s2 = inlined_call_operand.vmem [shape: f32[1,256], index: 2, kind: input, shape index: {}]
  %s3 = inlined_call_operand.hbm [shape: f32[128,128], index: 3, kind: input, shape index: {}]
  %s4 = inlined_call_operand.vmem [shape: f32[1,128], index: 4, kind: input, shape index: {}]
  %s5 = inlined_call_operand.hbm [shape: f32[16,128], index: 5, kind: output, shape index: {}]
  %s6 = sld [smem:[#allocation0]]
  $region54: #{tpu_custom_call.1} parent=0
    _
  %s8 = ssub.s32 1, %s6
  %s9 = scalar_select 0, %s8, %s6
  $region1: #{tpu_custom_call.1} parent=0
    #allocation3 [shape = 'u8[8192]{0}', space=vmem, size = 0x2000, scoped, tag = 'input window, operand 0, single buffered']
    #allocation4 [shape = 's32[1]{0}', space=sflag, size = 0x4, scoped, tag = 'scoped memory for tpu_custom_call.1']
    #allocation5 [shape = 's32[1]{0}', space=sflag, size = 0x4, scoped, tag = 'scoped memory for tpu_custom_call.1']
    #allocation6 [shape = 'u8[131072]{0}', space=vmem, size = 0x20000, scoped, tag = 'input window, operand 1, single buffered']
    #allocation7 [shape = 's32[1]{0}', space=sflag, size = 0x4, scoped, tag = 'scoped memory for tpu_custom_call.1']
    #allocation8 [shape = 'u8[65536]{0}', space=vmem, size = 0x10000, scoped, tag = 'input window, operand 3, single buffered']
    #allocation9 [shape = 'u8[8192]{0}', space=vmem, size = 0x2000, scoped, tag = 'output window, operand 0, single buffered']
    %10 = vsyncpa [#allocation4], 0
    %11 = vsyncpa [#allocation7], 0
    %12 = vsyncpa [#allocation5], 0
    // Predicated region
    $region2: #{tpu_custom_call.1} parent=1 // pred_check
      _
    $region3: #{tpu_custom_call.1} parent=1 // pred_check_branch
      %14 = sbr.rel (0) target = $region5
    $region4: #{tpu_custom_call.1} parent=1 // pred_region
      %s16 = ssub.s32 256, 256
      %17 = vsyncadd [#allocation4], %s16
      %s18 = sshll.u32 [#allocation3], 4
      %s19 = int_to_ptr.vmem [resolvable:$true] %s18
      %24 = dma.hbm_to_vmem [thread:$0]  %s0, 256, %s19, [#allocation4], 128, 128, 8
    $region5: #{tpu_custom_call.1} parent=1 // pred_fallthru
      _
    // Predicated region
    $region6: #{tpu_custom_call.1} parent=1 // pred_check
      _
    $region7: #{tpu_custom_call.1} parent=1 // pred_check_branch
      %26 = sbr.rel (0) target = $region9
    $region8: #{tpu_custom_call.1} parent=1 // pred_region
      %s28 = ssub.s32 4096, 4096
      %29 = vsyncadd [#allocation7], %s28
      %s30 = sshll.u32 [#allocation6], 4
      %s31 = int_to_ptr.vmem [resolvable:$true] %s30
      %36 = dma.hbm_to_vmem [thread:$0]  %s1, 4096, %s31, [#allocation7], 256, 256, 16
    $region9: #{tpu_custom_call.1} parent=1 // pred_fallthru
      _
    // Predicated region
    $region10: #{tpu_custom_call.1} parent=1 // pred_check
      _
    $region11: #{tpu_custom_call.1} parent=1 // pred_check_branch
      %38 = sbr.rel (0) target = $region13
    $region12: #{tpu_custom_call.1} parent=1 // pred_region
      _
    $region13: #{tpu_custom_call.1} parent=1 // pred_fallthru
      _
    // Predicated region
    $region14: #{tpu_custom_call.1} parent=1 // pred_check
      _
    $region15: #{tpu_custom_call.1} parent=1 // pred_check_branch
      %40 = sbr.rel (0) target = $region17
    $region16: #{tpu_custom_call.1} parent=1 // pred_region
      %s42 = ssub.s32 2048, 2048
      %43 = vsyncadd [#allocation7], %s42
      %s44 = sshll.u32 [#allocation8], 4
      %s45 = int_to_ptr.vmem [resolvable:$true] %s44
      %50 = dma.hbm_to_vmem [thread:$0]  %s3, 2048, %s45, [#allocation7], 128, 128, 8
    $region17: #{tpu_custom_call.1} parent=1 // pred_fallthru
      _
    // Predicated region
    $region18: #{tpu_custom_call.1} parent=1 // pred_check
      _
    $region19: #{tpu_custom_call.1} parent=1 // pred_check_branch
      %52 = sbr.rel (0) target = $region21
    $region20: #{tpu_custom_call.1} parent=1 // pred_region
      _
    $region21: #{tpu_custom_call.1} parent=1 // pred_fallthru
      _
    // Predicated region
    $region22: #{tpu_custom_call.1} parent=1 // pred_check
      _
    $region23: #{tpu_custom_call.1} parent=1 // pred_check_branch
      %54 = sbr.rel (0) target = $region25
    $region24: #{tpu_custom_call.1} parent=1 // pred_region
      %55 = dma.done [#allocation4], 256
    $region25: #{tpu_custom_call.1} parent=1 // pred_fallthru
      _
    // Predicated region
    $region26: #{tpu_custom_call.1} parent=1 // pred_check
      _
    $region27: #{tpu_custom_call.1} parent=1 // pred_check_branch
      %57 = sbr.rel (0) target = $region29
    $region28: #{tpu_custom_call.1} parent=1 // pred_region
      %58 = dma.done [#allocation7], 4096
    $region29: #{tpu_custom_call.1} parent=1 // pred_fallthru
      _
    // Predicated region
    $region30: #{tpu_custom_call.1} parent=1 // pred_check
      _
    $region31: #{tpu_custom_call.1} parent=1 // pred_check_branch
      %60 = sbr.rel (0) target = $region33
    $region32: #{tpu_custom_call.1} parent=1 // pred_region
      %61 = dma.done [#allocation7], 2048
    $region33: #{tpu_custom_call.1} parent=1 // pred_fallthru
      _
    %v62 = vld [vmem:[#allocation3] sm:$0xff]
    %v63 = vld [vmem:[#allocation3 + $0x8] sm:$0xff]
    %v64 = vld [vmem:[#allocation6] sm:$0xff]
    %v65 = vld [vmem:[#allocation6 + $0x8] sm:$0xff]
    %v66 = vld [vmem:[#allocation6 + $0x10] sm:$0xff]
    %v67 = vld [vmem:[#allocation6 + $0x18] sm:$0xff]
    %v68 = vld [vmem:[#allocation6 + $0x20] sm:$0xff]
    %v69 = vld [vmem:[#allocation6 + $0x28] sm:$0xff]
    %v70 = vld [vmem:[#allocation6 + $0x30] sm:$0xff]
    %v71 = vld [vmem:[#allocation6 + $0x38] sm:$0xff]
    %v72 = vld [vmem:[#allocation6 + $0x40] sm:$0xff]
    %v73 = vld [vmem:[#allocation6 + $0x48] sm:$0xff]
    %v74 = vld [vmem:[#allocation6 + $0x50] sm:$0xff]
    %v75 = vld [vmem:[#allocation6 + $0x58] sm:$0xff]
    %v76 = vld [vmem:[#allocation6 + $0x60] sm:$0xff]
    %v77 = vld [vmem:[#allocation6 + $0x68] sm:$0xff]
    %v78 = vld [vmem:[#allocation6 + $0x70] sm:$0xff]
    %v79 = vld [vmem:[#allocation6 + $0x78] sm:$0xff]
    %v80 = vld [vmem:[#allocation6 + $0x80] sm:$0xff]
    %v81 = vld [vmem:[#allocation6 + $0x88] sm:$0xff]
    %v82 = vld [vmem:[#allocation6 + $0x90] sm:$0xff]
    %v83 = vld [vmem:[#allocation6 + $0x98] sm:$0xff]
    %v84 = vld [vmem:[#allocation6 + $0xa0] sm:$0xff]
    %v85 = vld [vmem:[#allocation6 + $0xa8] sm:$0xff]
    %v86 = vld [vmem:[#allocation6 + $0xb0] sm:$0xff]
    %v87 = vld [vmem:[#allocation6 + $0xb8] sm:$0xff]
    %v88 = vld [vmem:[#allocation6 + $0xc0] sm:$0xff]
    %v89 = vld [vmem:[#allocation6 + $0xc8] sm:$0xff]
    %v90 = vld [vmem:[#allocation6 + $0xd0] sm:$0xff]
    %v91 = vld [vmem:[#allocation6 + $0xd8] sm:$0xff]
    %v92 = vld [vmem:[#allocation6 + $0xe0] sm:$0xff]
    %v93 = vld [vmem:[#allocation6 + $0xe8] sm:$0xff]
    %v94 = vld [vmem:[#allocation6 + $0xf0] sm:$0xff]
    %v95 = vld [vmem:[#allocation6 + $0xf8] sm:$0xff]
    %s96 = smul.u32 0, 2
    %s97 = scalar_lea.vmem %s2, %s96
    %v98 = vld [vmem:[%s97] sm:$0x3]
    %v100 = vlaneseq
    %v101 = vshrl.u32 %v100, 7
    %v102 = vsub.s32 0, %v101
    %v103 = vrot.slane %v98, %v102
    %v104 = vlaneseq
    %v105 = vshrl.u32 %v104, 7
    %v106 = vsub.s32 1, %v105
    %v107 = vrot.slane %v98, %v106
    %110 = vmatprep.subr.mxu0 %v95
    %111 = vmatpush1.msra.mxu0 %v94
    %112 = vmatprep.subr.mxu0 %v93
    %113 = vmatpush1.msra.mxu0 %v92
    %114 = vmatprep.subr.mxu0 %v91
    %115 = vmatpush1.msra.mxu0 %v90
    %116 = vmatprep.subr.mxu0 %v89
    %117 = vmatpush1.msra.mxu0 %v88
    %118 = vmatprep.subr.mxu0 %v87
    %119 = vmatpush1.msra.mxu0 %v86
    %120 = vmatprep.subr.mxu0 %v85
    %121 = vmatpush1.msra.mxu0 %v84
    %122 = vmatprep.subr.mxu0 %v83
    %123 = vmatpush1.msra.mxu0 %v82
    %124 = vmatprep.subr.mxu0 %v81
    %125 = vmatpush1.msra.mxu0 %v80
    %126 = vmatprep.subr.mxu0 %v79
    %127 = vmatpush1.msra.mxu0 %v78
    %128 = vmatprep.subr.mxu0 %v77
    %129 = vmatpush1.msra.mxu0 %v76
    %130 = vmatprep.subr.mxu0 %v75
    %131 = vmatpush1.msra.mxu0 %v74
    %132 = vmatprep.subr.mxu0 %v73
    %133 = vmatpush1.msra.mxu0 %v72
    %134 = vmatprep.subr.mxu0 %v71
    %135 = vmatpush1.msra.mxu0 %v70
    %136 = vmatprep.subr.mxu0 %v69
    %137 = vmatpush1.msra.mxu0 %v68
    %138 = vmatprep.subr.mxu0 %v67
    %139 = vmatpush1.msra.mxu0 %v66
    %140 = vmatprep.subr.mxu0 %v65
    %141 = vmatpush1.msra.mxu0 %v64
    %142 = vmatprep.subr.mxu0 0.0
    %143 = vmatpush2.msra.mxu0 0.0
    %144 = vmatprep.subr.mxu0 0.0
    %145 = vmatpush2.msra.mxu0 0.0
    %146 = vmatprep.subr.mxu0 0.0
    %147 = vmatpush2.msra.mxu0 0.0
    %148 = vmatprep.subr.mxu0 0.0
    %149 = vmatpush2.msra.mxu0 0.0
    %150 = vmatprep.subr.mxu0 0.0
    %151 = vmatpush2.msra.mxu0 0.0
    %152 = vmatprep.subr.mxu0 0.0
    %153 = vmatpush2.msra.mxu0 0.0
    %154 = vmatprep.subr.mxu0 0.0
    %155 = vmatpush2.msra.mxu0 0.0
    %156 = vmatprep.subr.mxu0 0.0
    %157 = vmatpush2.msra.mxu0 0.0
    %158 = vmatprep.subr.mxu0 0.0
    %159 = vmatpush2.msra.mxu0 0.0
    %160 = vmatprep.subr.mxu0 0.0
    %161 = vmatpush2.msra.mxu0 0.0
    %162 = vmatprep.subr.mxu0 0.0
    %163 = vmatpush2.msra.mxu0 0.0
    %164 = vmatprep.subr.mxu0 0.0
    %165 = vmatpush2.msra.mxu0 0.0
    %166 = vmatprep.subr.mxu0 0.0
    %167 = vmatpush2.msra.mxu0 0.0
    %168 = vmatprep.subr.mxu0 0.0
    %169 = vmatpush2.msra.mxu0 0.0
    %170 = vmatprep.subr.mxu0 0.0
    %171 = vmatpush2.msra.mxu0 0.0
    %172 = vmatprep.subr.mxu0 0.0
    %173 = vmatpush2.msra.mxu0 0.0
    %174 = vmatprep.mubr.f32.mxu0 0.0
    %175 = vmatmul.mubr.f32.gmra.mxu0 %v62
    %v176 = vpop.f32.mrf.mxu0
    %v177 = vadd.f32 %v103, %v176
    %v178 = vpop.f32.mrf.mxu0
    %v179 = vadd.f32 %v107, %v178
    %180 = vmatprep.mubr.f32.mxu0 0.0
    %181 = vmatmul.mubr.f32.gmra.mxu0 %v63
    %v182 = vpop.f32.mrf.mxu0
    %v183 = vadd.f32 %v103, %v182
    %v184 = vpop.f32.mrf.mxu0
    %v185 = vadd.f32 %v107, %v184
    %186 = vdwg.mxu0
    %v187 = vxor.u32 %v177, 2147483648
    %v188 = vxor.u32 %v183, 2147483648
    %v189 = vmul.f32 %v187, 1.442695
    %v190 = vpow.pop %v189
    %v191 = vmul.f32 %v188, 1.442695
    %v192 = vpow.pop %v191
    %v193 = vadd.f32 %v190, 1.0
    %v194 = vadd.f32 %v192, 1.0
    %v195 = vrcp.pop %v193
    %v196 = vmul.f32 1.0, %v195
    %v197 = vrcp.pop %v194
    %v198 = vmul.f32 1.0, %v197
    %v199 = vmul.f32 %v177, %v196
    %v200 = vmul.f32 %v183, %v198
    %v201 = vmul.f32 %v199, %v179
    %v202 = vmul.f32 %v200, %v185
    %v203 = vld [vmem:[#allocation8] sm:$0xff]
    %v204 = vld [vmem:[#allocation8 + $0x8] sm:$0xff]
    %v205 = vld [vmem:[#allocation8 + $0x10] sm:$0xff]
    %v206 = vld [vmem:[#allocation8 + $0x18] sm:$0xff]
    %v207 = vld [vmem:[#allocation8 + $0x20] sm:$0xff]
    %v208 = vld [vmem:[#allocation8 + $0x28] sm:$0xff]
    %v209 = vld [vmem:[#allocation8 + $0x30] sm:$0xff]
    %v210 = vld [vmem:[#allocation8 + $0x38] sm:$0xff]
    %v211 = vld [vmem:[#allocation8 + $0x40] sm:$0xff]
    %v212 = vld [vmem:[#allocation8 + $0x48] sm:$0xff]
    %v213 = vld [vmem:[#allocation8 + $0x50] sm:$0xff]
    %v214 = vld [vmem:[#allocation8 + $0x58] sm:$0xff]
    %v215 = vld [vmem:[#allocation8 + $0x60] sm:$0xff]
    %v216 = vld [vmem:[#allocation8 + $0x68] sm:$0xff]
    %v217 = vld [vmem:[#allocation8 + $0x70] sm:$0xff]
    %v218 = vld [vmem:[#allocation8 + $0x78] sm:$0xff]
    %219 = vmatprep.subr.mxu0 0.0
    %220 = vmatpush1.msra.mxu0 %v218
    %221 = vmatprep.subr.mxu0 0.0
    %222 = vmatpush1.msra.mxu0 %v217
    %223 = vmatprep.subr.mxu0 0.0
    %224 = vmatpush1.msra.mxu0 %v216
    %225 = vmatprep.subr.mxu0 0.0
    %226 = vmatpush1.msra.mxu0 %v215
    %227 = vmatprep.subr.mxu0 0.0
    %228 = vmatpush1.msra.mxu0 %v214
    %229 = vmatprep.subr.mxu0 0.0
    %230 = vmatpush1.msra.mxu0 %v213
    %231 = vmatprep.subr.mxu0 0.0
    %232 = vmatpush1.msra.mxu0 %v212
    %233 = vmatprep.subr.mxu0 0.0
    %234 = vmatpush1.msra.mxu0 %v211
    %235 = vmatprep.subr.mxu0 0.0
    %236 = vmatpush1.msra.mxu0 %v210
    %237 = vmatprep.subr.mxu0 0.0
    %238 = vmatpush1.msra.mxu0 %v209
    %239 = vmatprep.subr.mxu0 0.0
    %240 = vmatpush1.msra.mxu0 %v208
    %241 = vmatprep.subr.mxu0 0.0
    %242 = vmatpush1.msra.mxu0 %v207
    %243 = vmatprep.subr.mxu0 0.0
    %244 = vmatpush1.msra.mxu0 %v206
    %245 = vmatprep.subr.mxu0 0.0
    %246 = vmatpush1.msra.mxu0 %v205
    %247 = vmatprep.subr.mxu0 0.0
    %248 = vmatpush1.msra.mxu0 %v204
    %249 = vmatprep.subr.mxu0 0.0
    %250 = vmatpush1.msra.mxu0 %v203
    %251 = vmatprep.subr.mxu0 0.0
    %252 = vmatpush2.msra.mxu0 0.0
    %253 = vmatprep.subr.mxu0 0.0
    %254 = vmatpush2.msra.mxu0 0.0
    %255 = vmatprep.subr.mxu0 0.0
    %256 = vmatpush2.msra.mxu0 0.0
    %257 = vmatprep.subr.mxu0 0.0
    %258 = vmatpush2.msra.mxu0 0.0
    %259 = vmatprep.subr.mxu0 0.0
    %260 = vmatpush2.msra.mxu0 0.0
    %261 = vmatprep.subr.mxu0 0.0
    %262 = vmatpush2.msra.mxu0 0.0
    %263 = vmatprep.subr.mxu0 0.0
    %264 = vmatpush2.msra.mxu0 0.0
    %265 = vmatprep.subr.mxu0 0.0
    %266 = vmatpush2.msra.mxu0 0.0
    %267 = vmatprep.subr.mxu0 0.0
    %268 = vmatpush2.msra.mxu0 0.0
    %269 = vmatprep.subr.mxu0 0.0
    %270 = vmatpush2.msra.mxu0 0.0
    %271 = vmatprep.subr.mxu0 0.0
    %272 = vmatpush2.msra.mxu0 0.0
    %273 = vmatprep.subr.mxu0 0.0
    %274 = vmatpush2.msra.mxu0 0.0
    %275 = vmatprep.subr.mxu0 0.0
    %276 = vmatpush2.msra.mxu0 0.0
    %277 = vmatprep.subr.mxu0 0.0
    %278 = vmatpush2.msra.mxu0 0.0
    %279 = vmatprep.subr.mxu0 0.0
    %280 = vmatpush2.msra.mxu0 0.0
    %281 = vmatprep.subr.mxu0 0.0
    %282 = vmatpush2.msra.mxu0 0.0
    %283 = vmatprep.mubr.f32.mxu0 0.0
    %284 = vmatmul.mubr.f32.gmra.mxu0 %v201
    %v285 = vpop.f32.mrf.mxu0
    %v286 = vadd.f32 0.0, %v285
    %v287 = vpop.f32.mrf.mxu0
    %288 = vmatprep.mubr.f32.mxu0 0.0
    %289 = vmatmul.mubr.f32.gmra.mxu0 %v202
    %v290 = vpop.f32.mrf.mxu0
    %v291 = vadd.f32 0.0, %v290
    %v292 = vpop.f32.mrf.mxu0
    %293 = vdwg.mxu0
    %p294 = scmp.eq.s32.totalorder 0, 0
    // Predicated region
    $region34: #{tpu_custom_call.1} parent=1 // pred_check
      %p295 = pneg %p294
    $region35: #{tpu_custom_call.1} parent=1 // pred_check_branch
      %297 = sbr.rel (%p295) target = $region37
    $region36: #{tpu_custom_call.1} parent=1 // pred_region
      %v298 = vld [vmem:[%s4] sm:$0x1]
      %v300 = vlaneseq
      %v301 = vshrl.u32 %v300, 7
      %v302 = vsub.s32 0, %v301
      %v303 = vrot.slane %v298, %v302
      %v305 = vadd.f32 %v286, %v303
      %v306 = vadd.f32 %v291, %v303
      %307 = vst [vmem:[#allocation2] sm:$0xff] %v305
      %308 = vst [vmem:[#allocation2 + $0x8] sm:$0xff] %v306
    $region37: #{tpu_custom_call.1} parent=1 // pred_fallthru
      _
    %p309 = scmp.gt.s32.totalorder 0, 0
    // Predicated region
    $region38: #{tpu_custom_call.1} parent=1 // pred_check
      %p310 = pneg %p309
    $region39: #{tpu_custom_call.1} parent=1 // pred_check_branch
      %312 = sbr.rel (%p310) target = $region41
    $region40: #{tpu_custom_call.1} parent=1 // pred_region
      %v313 = vld [vmem:[#allocation2] sm:$0xff]
      %v314 = vld [vmem:[#allocation2 + $0x8] sm:$0xff]
      %v315 = vadd.f32 %v313, %v286
      %v316 = vadd.f32 %v314, %v291
      %317 = vst [vmem:[#allocation2] sm:$0xff] %v315
      %318 = vst [vmem:[#allocation2 + $0x8] sm:$0xff] %v316
    $region41: #{tpu_custom_call.1} parent=1 // pred_fallthru
      _
    // Predicated region
    $region42: #{tpu_custom_call.1} parent=1 // pred_check
      %p319 = pneg %p294
    $region43: #{tpu_custom_call.1} parent=1 // pred_check_branch
      %321 = sbr.rel (%p319) target = $region45
    $region44: #{tpu_custom_call.1} parent=1 // pred_region
      %v322 = vld [vmem:[#allocation2] sm:$0xff]
      %v323 = vld [vmem:[#allocation2 + $0x8] sm:$0xff]
      %324 = vst [vmem:[#allocation9] sm:$0xff] %v322
      %325 = vst [vmem:[#allocation9 + $0x8] sm:$0xff] %v323
    $region45: #{tpu_custom_call.1} parent=1 // pred_fallthru
      _
    // Predicated region
    $region46: #{tpu_custom_call.1} parent=1 // pred_check
      _
    $region47: #{tpu_custom_call.1} parent=1 // pred_check_branch
      %327 = sbr.rel (0) target = $region49
    $region48: #{tpu_custom_call.1} parent=1 // pred_region
      %s329 = ssub.s32 256, 256
      %330 = vsyncadd [#allocation5], %s329
      %s331 = sshll.u32 [#allocation9], 4
      %s332 = int_to_ptr.vmem [resolvable:$true] %s331
      %337 = dma.vmem_to_hbm [thread:$0]  %s332, 256, %s5, [#allocation5], 128, 128, 8
    $region49: #{tpu_custom_call.1} parent=1 // pred_fallthru
      _
    // Predicated region
    $region50: #{tpu_custom_call.1} parent=1 // pred_check
      _
    $region51: #{tpu_custom_call.1} parent=1 // pred_check_branch
      %339 = sbr.rel (0) target = $region53
    $region52: #{tpu_custom_call.1} parent=1 // pred_region
      %340 = dma.done [#allocation5], 256
    $region53: #{tpu_custom_call.1} parent=1 // pred_fallthru
      _
    %341 = vsyncpa [#allocation4], 1
    %342 = vsyncpa [#allocation7], 1
    %343 = vsyncpa [#allocation5], 1

</llo_original>
